<compile_context>
chip_gen: v6e
topology: v6e:2x2x1
jax: 0.10.0
libtpu: 0.0.40
codegen_flags: <defaults>
</compile_context>

<pallas_src>
import functools

import jax
import jax.numpy as jnp
from jax.experimental import pallas as pl
from jax.experimental.pallas import tpu as pltpu

LANE = 128
SUBLANE = 8


def _round_up(n, m):
    return ((n + m - 1) // m) * m


def _cdiv(a, b):
    return (a + b - 1) // b


def _pad2(a, rows, cols):
    return jnp.pad(a, ((0, rows - a.shape[0]), (0, cols - a.shape[1])))


# --------------------------------------------------------------------------
# Kernel: one batch tile -> 3 matmuls + bias + ReLU/ReLU/Tanh + action rescale
# --------------------------------------------------------------------------
def _actor_kernel(obs_ref, w1_ref, b1_ref, w2_ref, b2_ref, w3_ref, b3_ref,
                  ss_ref, out_ref):
    wdt = w1_ref.dtype  # f32 or bf16 weights; MXU accumulates in f32 either way

    # Layer 1: Linear + ReLU   (K = true obs_dim, N = h1_p)
    h = jnp.dot(obs_ref[...].astype(wdt), w1_ref[...],
                preferred_element_type=jnp.float32) + b1_ref[...]
    h = jnp.maximum(h, 0.0)

    # Layer 2: Linear + ReLU
    h = jnp.dot(h.astype(wdt), w2_ref[...],
                preferred_element_type=jnp.float32) + b2_ref[...]
    h = jnp.maximum(h, 0.0)

    # Output layer: Linear + Tanh
    h = jnp.dot(h.astype(wdt), w3_ref[...],
                preferred_element_type=jnp.float32) + b3_ref[...]
    pi = jnp.tanh(h)

    # Rescale (-1, 1) -> (act_low, act_high). ss row 0 = scale, row 1 = shift.
    out_ref[...] = (ss_ref[0:1, :] * pi + ss_ref[1:2, :]).astype(out_ref.dtype)


# --------------------------------------------------------------------------
# One-time parameter preparation (hoisted out of the per-step forward).
# --------------------------------------------------------------------------
def prepare_actor_params(params, act_high, act_low, param_dtype=None):
    """Pads / casts parameters once.  Returns (arrays_tuple, act_dim)."""
    w1, b1, w2, b2, w3, b3 = params
    obs_dim = w1.shape[0]
    h1_dim, h2_dim, act_dim = w1.shape[1], w2.shape[1], w3.shape[1]

    h1_p = _round_up(h1_dim, LANE)
    h2_p = _round_up(h2_dim, LANE)
    act_p = _round_up(act_dim, LANE)

    if param_dtype is None:
        # VMEM guard (v7x has 64 MiB): switch the resident weights to bf16
        # only once the f32 footprint becomes large; small nets stay f32
        # (also the safe choice on v5e, which has no bf16 VALU path).
        f32_resident = (obs_dim * h1_p + h1_p * h2_p + h2_p * act_p) * 4
        param_dtype = jnp.bfloat16 if f32_resident > (24 << 20) else jnp.float32

    # Padding is mathematically inert: zero weight rows/cols, zero bias,
    # zero scale/shift -> padded output lanes are exactly 0 and get sliced off.
    w1p = _pad2(w1.astype(jnp.float32), obs_dim, h1_p).astype(param_dtype)
    w2p = _pad2(w2.astype(jnp.float32), h1_p, h2_p).astype(param_dtype)
    w3p = _pad2(w3.astype(jnp.float32), h2_p, act_p).astype(param_dtype)
    b1p = _pad2(b1.reshape(1, -1).astype(jnp.float32), 1, h1_p)
    b2p = _pad2(b2.reshape(1, -1).astype(jnp.float32), 1, h2_p)
    b3p = _pad2(b3.reshape(1, -1).astype(jnp.float32), 1, act_p)

    scale = (0.5 * (act_high - act_low)).reshape(1, -1).astype(jnp.float32)
    shift = (0.5 * (act_high + act_low)).reshape(1, -1).astype(jnp.float32)
    ssp = _pad2(jnp.concatenate([scale, shift], axis=0), 2, act_p)  # [2, act_p]

    arrays = (w1p, b1p, w2p, b2p, w3p, b3p, ssp)
    return jax.tree.map(jax.device_put, arrays), int(act_dim)


def _choose_tile(B, block_b):
    """Batch tile so the grid splits evenly in two (v7x megacore balance)."""
    n_tiles = _cdiv(B, block_b)
    if n_tiles > 1 and n_tiles % 2 == 1:
        n_tiles += 1
    tb = _round_up(max(1, _cdiv(B, n_tiles)), SUBLANE)
    return tb, _cdiv(B, tb)


# --------------------------------------------------------------------------
# Jitted forward: obs + pre-padded params only.
# --------------------------------------------------------------------------
@functools.partial(jax.jit, static_argnames=("act_dim", "block_b"))
def _forward_impl(obs, w1p, b1p, w2p, b2p, w3p, b3p, ssp, *, act_dim, block_b):
    B, obs_dim = obs.shape
    h1_p = w1p.shape[1]
    h2_p = w2p.shape[1]
    act_p = w3p.shape[1]

    tb, grid_b = _choose_tile(B, block_b)

    # Honest VMEM budget: resident params (x2 for pipeline buffering slack),
    # double-buffered obs/out streams, in-kernel activations, + 4 MiB headroom.
    itm = jnp.dtype(w1p.dtype).itemsize
    resident_b = (obs_dim * h1_p + h1_p * h2_p + h2_p * act_p) * itm \
        + (h1_p + h2_p + act_p + 2 * act_p) * 4
    stream_b = 2 * tb * (obs_dim + act_p) * 4
    act_b = tb * (h1_p + h2_p + act_p) * 4
    vmem_bytes = int(2 * resident_b + stream_b + act_b + (4 << 20))

    out_padded = pl.pallas_call(
        _actor_kernel,
        out_shape=jax.ShapeDtypeStruct((B, act_p), jnp.float32),
        grid=(grid_b,),
        in_specs=[
            pl.BlockSpec((tb, obs_dim), lambda i: (i, 0)),     # obs: streamed, unpadded K
            pl.BlockSpec((obs_dim, h1_p), lambda i: (0, 0)),   # W1: VMEM-resident
            pl.BlockSpec((1, h1_p), lambda i: (0, 0)),         # b1
            pl.BlockSpec((h1_p, h2_p), lambda i: (0, 0)),      # W2
            pl.BlockSpec((1, h2_p), lambda i: (0, 0)),         # b2
            pl.BlockSpec((h2_p, act_p), lambda i: (0, 0)),     # W3
            pl.BlockSpec((1, act_p), lambda i: (0, 0)),        # b3
            pl.BlockSpec((2, act_p), lambda i: (0, 0)),        # [scale; shift]
        ],
        out_specs=pl.BlockSpec((tb, act_p), lambda i: (i, 0)), # lane-dense store
        compiler_params=pltpu.CompilerParams(
            dimension_semantics=("parallel",),                 # megacore split on v7x
            vmem_limit_bytes=vmem_bytes,
        ),
    )(obs, w1p, b1p, w2p, b2p, w3p, b3p, ssp)

    # Only the (small) feature slice remains; no batch pad / batch slice.
    return out_padded[:, :act_dim]


def mlp_actor_forward(obs, prepared, *, block_b=1024):
    """Fused MLPActor forward. `prepared` comes from prepare_actor_params()."""
    arrays, act_dim = prepared
    return _forward_impl(obs, *arrays, act_dim=act_dim, block_b=block_b)


# --------------------------------------------------------------------------
# Reference + init helpers
# --------------------------------------------------------------------------
def init_params(key, obs_dim, hidden_sizes, act_dim):
    """torch.nn.Linear-style init (uniform +-1/sqrt(fan_in)); W stored [in, out]."""
    sizes = [obs_dim] + list(hidden_sizes) + [act_dim]
    params = []
    for i in range(len(sizes) - 1):
        fan_in, fan_out = sizes[i], sizes[i + 1]
        key, kw, kb = jax.random.split(key, 3)
        bound = 1.0 / (fan_in ** 0.5)
        w = jax.random.uniform(kw, (fan_in, fan_out), jnp.float32, -bound, bound)
        b = jax.random.uniform(kb, (fan_out,), jnp.float32, -bound, bound)
        params.extend([w, b])
    return tuple(params)


def reference_forward(obs, params, act_high, act_low):
    w1, b1, w2, b2, w3, b3 = params
    h = jnp.maximum(obs @ w1 + b1, 0.0)
    h = jnp.maximum(h @ w2 + b2, 0.0)
    pi = jnp.tanh(h @ w3 + b3)
    return 0.5 * (act_high - act_low) * pi + 0.5 * (act_high + act_low)


if __name__ == "__main__":
    key = jax.random.PRNGKey(0)

    # Small shapes consistent with the module's forward.
    B, obs_dim, act_dim = 8, 16, 8
    hidden_sizes = (32, 32)

    kp, kx = jax.random.split(key)
    params = init_params(kp, obs_dim, hidden_sizes, act_dim)
    obs = jax.random.normal(kx, (B, obs_dim), jnp.float32)

    # Deterministic, asymmetric action bounds (exercise both scale & shift).
    act_high = jnp.linspace(1.0, 2.0, act_dim, dtype=jnp.float32)
    act_low = -jnp.linspace(0.5, 1.5, act_dim, dtype=jnp.float32)

    prepared = prepare_actor_params(params, act_high, act_low)   # one-time prep

    out = jax.block_until_ready(mlp_actor_forward(obs, prepared))
    ref = reference_forward(obs, params, act_high, act_low)
    assert out.shape == (B, act_dim)
    assert jnp.allclose(out, ref, atol=1e-5, rtol=1e-5), "mismatch vs reference"

    # Also exercise the batch-tiled path (grid > 1, non-divisible ragged batch).
    B2 = 1037
    obs2 = jax.random.normal(jax.random.PRNGKey(1), (B2, obs_dim), jnp.float32)
    out2 = jax.block_until_ready(mlp_actor_forward(obs2, prepared, block_b=512))
    ref2 = reference_forward(obs2, params, act_high, act_low)
    assert out2.shape == (B2, act_dim)
    assert jnp.allclose(out2, ref2, atol=1e-5, rtol=1e-5), "tiled mismatch"

    print("KERNEL_OK")
</pallas_src>

<mosaic_0001>
module attributes {stable_mosaic.version = 11 : i64} {
  func.func @_actor_kernel(%arg0: i32, %arg1: memref<8x16xf32, #tpu.memory_space<vmem>>, %arg2: memref<16x128xf32, #tpu.memory_space<vmem>>, %arg3: memref<1x128xf32, #tpu.memory_space<vmem>>, %arg4: memref<128x128xf32, #tpu.memory_space<vmem>>, %arg5: memref<1x128xf32, #tpu.memory_space<vmem>>, %arg6: memref<128x128xf32, #tpu.memory_space<vmem>>, %arg7: memref<1x128xf32, #tpu.memory_space<vmem>>, %arg8: memref<2x128xf32, #tpu.memory_space<vmem>>, %arg9: memref<8x128xf32, #tpu.memory_space<vmem>>) attributes {dimension_semantics = [#tpu.dimension_semantics<parallel>], iteration_bounds = array<i64: 1>, scalar_prefetch = 0 : i64, scratch_operands = 0 : i64, tpu.core_type = #tpu.core_type<tc>, window_params = [{transform_indices = @transform_0, window_bounds = array<i64: 8, 16>}, {pipeline_mode = #tpu.pipeline_mode<synchronous>, transform_indices = @transform_1, window_bounds = array<i64: 16, 128>}, {pipeline_mode = #tpu.pipeline_mode<synchronous>, transform_indices = @transform_2, window_bounds = array<i64: 1, 128>}, {pipeline_mode = #tpu.pipeline_mode<synchronous>, transform_indices = @transform_3, window_bounds = array<i64: 128, 128>}, {pipeline_mode = #tpu.pipeline_mode<synchronous>, transform_indices = @transform_4, window_bounds = array<i64: 1, 128>}, {pipeline_mode = #tpu.pipeline_mode<synchronous>, transform_indices = @transform_5, window_bounds = array<i64: 128, 128>}, {pipeline_mode = #tpu.pipeline_mode<synchronous>, transform_indices = @transform_6, window_bounds = array<i64: 1, 128>}, {pipeline_mode = #tpu.pipeline_mode<synchronous>, transform_indices = @transform_7, window_bounds = array<i64: 2, 128>}, {transform_indices = @transform_8, window_bounds = array<i64: 8, 128>}]} {
    %c0 = arith.constant 0 : index
    %c0_0 = arith.constant 0 : index
    %0 = vector.load %arg1[%c0, %c0_0] : memref<8x16xf32, #tpu.memory_space<vmem>>, vector<8x16xf32>
    %c0_1 = arith.constant 0 : index
    %c0_2 = arith.constant 0 : index
    %1 = vector.load %arg2[%c0_1, %c0_2] : memref<16x128xf32, #tpu.memory_space<vmem>>, vector<16x128xf32>
    %cst = arith.constant dense<0.000000e+00> : vector<8x128xf32>
    %2 = tpu.matmul %0, %1, %cst {dimension_numbers = #tpu.dot_dimension_numbers<[1], [0], [0], [1], [0, 0, 1, 1], [], []>} : vector<8x16xf32>, vector<16x128xf32>, vector<8x128xf32> -> vector<8x128xf32>
    %c0_3 = arith.constant 0 : index
    %c0_4 = arith.constant 0 : index
    %3 = vector.load %arg3[%c0_3, %c0_4] : memref<1x128xf32, #tpu.memory_space<vmem>>, vector<1x128xf32>
    %4 = vector.broadcast %3 : vector<1x128xf32> to vector<8x128xf32>
    %5 = arith.addf %2, %4 : vector<8x128xf32>
    %cst_5 = arith.constant 0.000000e+00 : f32
    %6 = vector.broadcast %cst_5 : f32 to vector<8x128xf32>
    %7 = arith.maximumf %5, %6 : vector<8x128xf32>
    %c0_6 = arith.constant 0 : index
    %c0_7 = arith.constant 0 : index
    %8 = vector.load %arg4[%c0_6, %c0_7] : memref<128x128xf32, #tpu.memory_space<vmem>>, vector<128x128xf32>
    %cst_8 = arith.constant dense<0.000000e+00> : vector<8x128xf32>
    %9 = tpu.matmul %7, %8, %cst_8 {dimension_numbers = #tpu.dot_dimension_numbers<[1], [0], [0], [1], [0, 0, 1, 1], [], []>} : vector<8x128xf32>, vector<128x128xf32>, vector<8x128xf32> -> vector<8x128xf32>
    %c0_9 = arith.constant 0 : index
    %c0_10 = arith.constant 0 : index
    %10 = vector.load %arg5[%c0_9, %c0_10] : memref<1x128xf32, #tpu.memory_space<vmem>>, vector<1x128xf32>
    %11 = vector.broadcast %10 : vector<1x128xf32> to vector<8x128xf32>
    %12 = arith.addf %9, %11 : vector<8x128xf32>
    %cst_11 = arith.constant 0.000000e+00 : f32
    %13 = vector.broadcast %cst_11 : f32 to vector<8x128xf32>
    %14 = arith.maximumf %12, %13 : vector<8x128xf32>
    %c0_12 = arith.constant 0 : index
    %c0_13 = arith.constant 0 : index
    %15 = vector.load %arg6[%c0_12, %c0_13] : memref<128x128xf32, #tpu.memory_space<vmem>>, vector<128x128xf32>
    %cst_14 = arith.constant dense<0.000000e+00> : vector<8x128xf32>
    %16 = tpu.matmul %14, %15, %cst_14 {dimension_numbers = #tpu.dot_dimension_numbers<[1], [0], [0], [1], [0, 0, 1, 1], [], []>} : vector<8x128xf32>, vector<128x128xf32>, vector<8x128xf32> -> vector<8x128xf32>
    %c0_15 = arith.constant 0 : index
    %c0_16 = arith.constant 0 : index
    %17 = vector.load %arg7[%c0_15, %c0_16] : memref<1x128xf32, #tpu.memory_space<vmem>>, vector<1x128xf32>
    %18 = vector.broadcast %17 : vector<1x128xf32> to vector<8x128xf32>
    %19 = arith.addf %16, %18 : vector<8x128xf32>
    %20 = math.tanh %19 : vector<8x128xf32>
    %c0_17 = arith.constant 0 : index
    %c0_18 = arith.constant 0 : index
    %21 = vector.load %arg8[%c0_17, %c0_18] : memref<2x128xf32, #tpu.memory_space<vmem>>, vector<1x128xf32>
    %22 = vector.broadcast %21 : vector<1x128xf32> to vector<8x128xf32>
    %23 = arith.mulf %22, %20 : vector<8x128xf32>
    %c1 = arith.constant 1 : index
    %c0_19 = arith.constant 0 : index
    %24 = vector.load %arg8[%c1, %c0_19] : memref<2x128xf32, #tpu.memory_space<vmem>>, vector<1x128xf32>
    %25 = vector.broadcast %24 : vector<1x128xf32> to vector<8x128xf32>
    %26 = arith.addf %23, %25 : vector<8x128xf32>
    %c0_20 = arith.constant 0 : index
    %c0_21 = arith.constant 0 : index
    %27 = vector.load %arg9[%c0_20, %c0_21] : memref<8x128xf32, #tpu.memory_space<vmem>>, vector<8x128xf32>
    tpu.vector_store %arg9[%c0_20, %c0_21], %26 {strides = array<i32>} : memref<8x128xf32, #tpu.memory_space<vmem>>, vector<8x128xf32>,
    return
  }
  func.func @transform_0(%arg0: i32) -> (i32, i32) {
    %c0_i32 = arith.constant 0 : i32
    %c0_i32_0 = arith.constant 0 : i32
    return %arg0, %c0_i32 : i32, i32
  }
  func.func @transform_1(%arg0: i32) -> (i32, i32) {
    %c0_i32 = arith.constant 0 : i32
    %c0_i32_0 = arith.constant 0 : i32
    %c0_i32_1 = arith.constant 0 : i32
    return %c0_i32, %c0_i32_0 : i32, i32
  }
  func.func @transform_2(%arg0: i32) -> (i32, i32) {
    %c0_i32 = arith.constant 0 : i32
    %c0_i32_0 = arith.constant 0 : i32
    %c0_i32_1 = arith.constant 0 : i32
    return %c0_i32, %c0_i32_0 : i32, i32
  }
  func.func @transform_3(%arg0: i32) -> (i32, i32) {
    %c0_i32 = arith.constant 0 : i32
    %c0_i32_0 = arith.constant 0 : i32
    %c0_i32_1 = arith.constant 0 : i32
    return %c0_i32, %c0_i32_0 : i32, i32
  }
  func.func @transform_4(%arg0: i32) -> (i32, i32) {
    %c0_i32 = arith.constant 0 : i32
    %c0_i32_0 = arith.constant 0 : i32
    %c0_i32_1 = arith.constant 0 : i32
    return %c0_i32, %c0_i32_0 : i32, i32
  }
  func.func @transform_5(%arg0: i32) -> (i32, i32) {
    %c0_i32 = arith.constant 0 : i32
    %c0_i32_0 = arith.constant 0 : i32
    %c0_i32_1 = arith.constant 0 : i32
    return %c0_i32, %c0_i32_0 : i32, i32
  }
  func.func @transform_6(%arg0: i32) -> (i32, i32) {
    %c0_i32 = arith.constant 0 : i32
    %c0_i32_0 = arith.constant 0 : i32
    %c0_i32_1 = arith.constant 0 : i32
    return %c0_i32, %c0_i32_0 : i32, i32
  }
  func.func @transform_7(%arg0: i32) -> (i32, i32) {
    %c0_i32 = arith.constant 0 : i32
    %c0_i32_0 = arith.constant 0 : i32
    %c0_i32_1 = arith.constant 0 : i32
    return %c0_i32, %c0_i32_0 : i32, i32
  }
  func.func @transform_8(%arg0: i32) -> (i32, i32) {
    %c0_i32 = arith.constant 0 : i32
    %c0_i32_0 = arith.constant 0 : i32
    return %arg0, %c0_i32 : i32, i32
  }
}

</mosaic_0001>

<llo_original>
// kernel: _forward_impl.1
$region0: #{_forward_impl.1}
  #allocation0 [shape = 'u32[]', space=smem, size = 0x4, offset = 0x4, fixed_abs, tag = 'smem constant byte address 0x4 - core index']
  #allocation1 [shape = 'u32[144,128]{1,0:T(1,128)}', space=vmem, size = 0x12000, scoped, tag = 'internal scratch']
  %s0 = inlined_call_operand.hbm [shape: f32[8,16], index: 0, kind: input, shape index: {}]
  %s1 = inlined_call_operand.hbm [shape: f32[16,128], index: 1, kind: input, shape index: {}]
  %s2 = inlined_call_operand.vmem [shape: f32[1,128], index: 2, kind: input, shape index: {}]
  %s3 = inlined_call_operand.hbm [shape: f32[128,128], index: 3, kind: input, shape index: {}]
  %s4 = inlined_call_operand.vmem [shape: f32[1,128], index: 4, kind: input, shape index: {}]
  %s5 = inlined_call_operand.hbm [shape: f32[128,128], index: 5, kind: input, shape index: {}]
  %s6 = inlined_call_operand.vmem [shape: f32[1,128], index: 6, kind: input, shape index: {}]
  %s7 = inlined_call_operand.vmem [shape: f32[2,128], index: 7, kind: input, shape index: {}]
  %s8 = inlined_call_operand.hbm [shape: f32[8,128], index: 8, kind: output, shape index: {}]
  %s9 = sld [smem:[#allocation0]]
  $region58: #{_forward_impl.1} parent=0
    _
  %s11 = ssub.s32 1, %s9
  %s12 = scalar_select 0, %s11, %s9
  $region1: #{_forward_impl.1} parent=0
    #allocation2 [shape = 'u8[4096]{0}', space=vmem, size = 0x1000, scoped, tag = 'input window, operand 0, single buffered']
    #allocation3 [shape = 's32[1]{0}', space=sflag, size = 0x4, scoped, tag = 'scoped memory for _forward_impl.1']
    #allocation4 [shape = 's32[1]{0}', space=sflag, size = 0x4, scoped, tag = 'scoped memory for _forward_impl.1']
    #allocation5 [shape = 'u8[8192]{0}', space=vmem, size = 0x2000, scoped, tag = 'input window, operand 1, single buffered']
    #allocation6 [shape = 's32[1]{0}', space=sflag, size = 0x4, scoped, tag = 'scoped memory for _forward_impl.1']
    #allocation7 [shape = 'u8[65536]{0}', space=vmem, size = 0x10000, scoped, tag = 'input window, operand 3, single buffered']
    #allocation8 [shape = 'u8[65536]{0}', space=vmem, size = 0x10000, scoped, tag = 'input window, operand 5, single buffered']
    #allocation9 [shape = 's32[1]{0}', space=sflag, size = 0x4, scoped, tag = 'scoped memory for _forward_impl.1']
    #allocation10 [shape = 'u8[4096]{0}', space=vmem, size = 0x1000, scoped, tag = 'output window, operand 0, single buffered']
    %13 = vsyncpa [#allocation3], 0
    %14 = vsyncpa [#allocation6], 0
    %15 = vsyncpa [#allocation9], 0
    %16 = vsyncpa [#allocation4], 0
    // Predicated region
    $region2: #{_forward_impl.1} parent=1 // pred_check
      _
    $region3: #{_forward_impl.1} parent=1 // pred_check_branch
      %18 = sbr.rel (0) target = $region5
    $region4: #{_forward_impl.1} parent=1 // pred_region
      %s20 = ssub.s32 128, 128
      %21 = vsyncadd [#allocation3], %s20
      %s23 = sshll.u32 [#allocation2], 4
      %s24 = int_to_ptr.vmem [resolvable:$true] %s23
      %26 = dma.hbm_to_vmem [thread:$0]  %s0, 128, %s24, [#allocation3]
    $region5: #{_forward_impl.1} parent=1 // pred_fallthru
      _
    // Predicated region
    $region6: #{_forward_impl.1} parent=1 // pred_check
      _
    $region7: #{_forward_impl.1} parent=1 // pred_check_branch
      %28 = sbr.rel (0) target = $region9
    $region8: #{_forward_impl.1} parent=1 // pred_region
      %s30 = ssub.s32 256, 256
      %31 = vsyncadd [#allocation6], %s30
      %s32 = sshll.u32 [#allocation5], 4
      %s33 = int_to_ptr.vmem [resolvable:$true] %s32
      %38 = dma.hbm_to_vmem [thread:$0]  %s1, 256, %s33, [#allocation6], 128, 128, 8
    $region9: #{_forward_impl.1} parent=1 // pred_fallthru
      _
    // Predicated region
    $region10: #{_forward_impl.1} parent=1 // pred_check
      _
    $region11: #{_forward_impl.1} parent=1 // pred_check_branch
      %40 = sbr.rel (0) target = $region13
    $region12: #{_forward_impl.1} parent=1 // pred_region
      _
    $region13: #{_forward_impl.1} parent=1 // pred_fallthru
      _
    // Predicated region
    $region14: #{_forward_impl.1} parent=1 // pred_check
      _
    $region15: #{_forward_impl.1} parent=1 // pred_check_branch
      %42 = sbr.rel (0) target = $region17
    $region16: #{_forward_impl.1} parent=1 // pred_region
      %s44 = ssub.s32 2048, 2048
      %45 = vsyncadd [#allocation6], %s44
      %s46 = sshll.u32 [#allocation7], 4
      %s47 = int_to_ptr.vmem [resolvable:$true] %s46
      %52 = dma.hbm_to_vmem [thread:$0]  %s3, 2048, %s47, [#allocation6], 128, 128, 8
    $region17: #{_forward_impl.1} parent=1 // pred_fallthru
      _
    // Predicated region
    $region18: #{_forward_impl.1} parent=1 // pred_check
      _
    $region19: #{_forward_impl.1} parent=1 // pred_check_branch
      %54 = sbr.rel (0) target = $region21
    $region20: #{_forward_impl.1} parent=1 // pred_region
      _
    $region21: #{_forward_impl.1} parent=1 // pred_fallthru
      _
    // Predicated region
    $region22: #{_forward_impl.1} parent=1 // pred_check
      _
    $region23: #{_forward_impl.1} parent=1 // pred_check_branch
      %56 = sbr.rel (0) target = $region25
    $region24: #{_forward_impl.1} parent=1 // pred_region
      %s58 = ssub.s32 2048, 2048
      %59 = vsyncadd [#allocation9], %s58
      %s60 = sshll.u32 [#allocation8], 4
      %s61 = int_to_ptr.vmem [resolvable:$true] %s60
      %66 = dma.hbm_to_vmem [thread:$0]  %s5, 2048, %s61, [#allocation9], 128, 128, 8
    $region25: #{_forward_impl.1} parent=1 // pred_fallthru
      _
    // Predicated region
    $region26: #{_forward_impl.1} parent=1 // pred_check
      _
    $region27: #{_forward_impl.1} parent=1 // pred_check_branch
      %68 = sbr.rel (0) target = $region29
    $region28: #{_forward_impl.1} parent=1 // pred_region
      _
    $region29: #{_forward_impl.1} parent=1 // pred_fallthru
      _
    // Predicated region
    $region30: #{_forward_impl.1} parent=1 // pred_check
      _
    $region31: #{_forward_impl.1} parent=1 // pred_check_branch
      %70 = sbr.rel (0) target = $region33
    $region32: #{_forward_impl.1} parent=1 // pred_region
      _
    $region33: #{_forward_impl.1} parent=1 // pred_fallthru
      _
    // Predicated region
    $region34: #{_forward_impl.1} parent=1 // pred_check
      _
    $region35: #{_forward_impl.1} parent=1 // pred_check_branch
      %72 = sbr.rel (0) target = $region37
    $region36: #{_forward_impl.1} parent=1 // pred_region
      %73 = dma.done [#allocation3], 128
    $region37: #{_forward_impl.1} parent=1 // pred_fallthru
      _
    // Predicated region
    $region38: #{_forward_impl.1} parent=1 // pred_check
      _
    $region39: #{_forward_impl.1} parent=1 // pred_check_branch
      %75 = sbr.rel (0) target = $region41
    $region40: #{_forward_impl.1} parent=1 // pred_region
      %76 = dma.done [#allocation6], 256
    $region41: #{_forward_impl.1} parent=1 // pred_fallthru
      _
    // Predicated region
    $region42: #{_forward_impl.1} parent=1 // pred_check
      _
    $region43: #{_forward_impl.1} parent=1 // pred_check_branch
      %78 = sbr.rel (0) target = $region45
    $region44: #{_forward_impl.1} parent=1 // pred_region
      %79 = dma.done [#allocation6], 2048
    $region45: #{_forward_impl.1} parent=1 // pred_fallthru
      _
    // Predicated region
    $region46: #{_forward_impl.1} parent=1 // pred_check
      _
    $region47: #{_forward_impl.1} parent=1 // pred_check_branch
      %81 = sbr.rel (0) target = $region49
    $region48: #{_forward_impl.1} parent=1 // pred_region
      %82 = dma.done [#allocation9], 2048
    $region49: #{_forward_impl.1} parent=1 // pred_fallthru
      _
    %v83 = vld [vmem:[#allocation2] sm:$0xff]
    %v84 = vld [vmem:[#allocation5] sm:$0xff]
    %v85 = vld [vmem:[#allocation5 + $0x8] sm:$0xff]
    %v86 = vld [vmem:[%s2] sm:$0x1]
    %v88 = vlaneseq
    %v89 = vshrl.u32 %v88, 7
    %v90 = vsub.s32 0, %v89
    %v91 = vrot.slane %v86, %v90
    %vm93 = vcmask 130048
    %v95 = vsel %vm93, %v83, 0
    %97 = vmatprep.subr.mxu0 0.0
    %98 = vmatpush1.msra.mxu0 0.0
    %99 = vmatprep.subr.mxu0 0.0
    %100 = vmatpush1.msra.mxu0 0.0
    %101 = vmatprep.subr.mxu0 0.0
    %102 = vmatpush1.msra.mxu0 0.0
    %103 = vmatprep.subr.mxu0 0.0
    %104 = vmatpush1.msra.mxu0 0.0
    %105 = vmatprep.subr.mxu0 0.0
    %106 = vmatpush1.msra.mxu0 0.0
    %107 = vmatprep.subr.mxu0 0.0
    %108 = vmatpush1.msra.mxu0 0.0
    %109 = vmatprep.subr.mxu0 0.0
    %110 = vmatpush1.msra.mxu0 0.0
    %111 = vmatprep.subr.mxu0 0.0
    %112 = vmatpush1.msra.mxu0 0.0
    %113 = vmatprep.subr.mxu0 0.0
    %114 = vmatpush1.msra.mxu0 0.0
    %115 = vmatprep.subr.mxu0 0.0
    %116 = vmatpush1.msra.mxu0 0.0
    %117 = vmatprep.subr.mxu0 0.0
    %118 = vmatpush1.msra.mxu0 0.0
    %119 = vmatprep.subr.mxu0 0.0
    %120 = vmatpush1.msra.mxu0 0.0
    %121 = vmatprep.subr.mxu0 0.0
    %122 = vmatpush1.msra.mxu0 0.0
    %123 = vmatprep.subr.mxu0 0.0
    %124 = vmatpush1.msra.mxu0 0.0
    %125 = vmatprep.subr.mxu0 0.0
    %126 = vmatpush1.msra.mxu0 %v85
    %127 = vmatprep.subr.mxu0 0.0
    %128 = vmatpush1.msra.mxu0 %v84
    %129 = vmatprep.subr.mxu0 0.0
    %130 = vmatpush2.msra.mxu0 0.0
    %131 = vmatprep.subr.mxu0 0.0
    %132 = vmatpush2.msra.mxu0 0.0
    %133 = vmatprep.subr.mxu0 0.0
    %134 = vmatpush2.msra.mxu0 0.0
    %135 = vmatprep.subr.mxu0 0.0
    %136 = vmatpush2.msra.mxu0 0.0
    %137 = vmatprep.subr.mxu0 0.0
    %138 = vmatpush2.msra.mxu0 0.0
    %139 = vmatprep.subr.mxu0 0.0
    %140 = vmatpush2.msra.mxu0 0.0
    %141 = vmatprep.subr.mxu0 0.0
    %142 = vmatpush2.msra.mxu0 0.0
    %143 = vmatprep.subr.mxu0 0.0
    %144 = vmatpush2.msra.mxu0 0.0
    %145 = vmatprep.subr.mxu0 0.0
    %146 = vmatpush2.msra.mxu0 0.0
    %147 = vmatprep.subr.mxu0 0.0
    %148 = vmatpush2.msra.mxu0 0.0
    %149 = vmatprep.subr.mxu0 0.0
    %150 = vmatpush2.msra.mxu0 0.0
    %151 = vmatprep.subr.mxu0 0.0
    %152 = vmatpush2.msra.mxu0 0.0
    %153 = vmatprep.subr.mxu0 0.0
    %154 = vmatpush2.msra.mxu0 0.0
    %155 = vmatprep.subr.mxu0 0.0
    %156 = vmatpush2.msra.mxu0 0.0
    %157 = vmatprep.subr.mxu0 0.0
    %158 = vmatpush2.msra.mxu0 0.0
    %159 = vmatprep.subr.mxu0 0.0
    %160 = vmatpush2.msra.mxu0 0.0
    %161 = vmatprep.mubr.f32.mxu0 0.0
    %162 = vmatmul.mubr.f32.gmra.mxu0 %v95
    %v163 = vpop.f32.mrf.mxu0
    %v164 = vadd.f32 %v91, %v163
    %v165 = vpop.f32.mrf.mxu0
    %166 = vdwg.mxu0
    %v167 = vmax.f32 %v164, 0.0
    %v168 = vld [vmem:[#allocation7] sm:$0xff]
    %v169 = vld [vmem:[#allocation7 + $0x8] sm:$0xff]
    %v170 = vld [vmem:[#allocation7 + $0x10] sm:$0xff]
    %v171 = vld [vmem:[#allocation7 + $0x18] sm:$0xff]
    %v172 = vld [vmem:[#allocation7 + $0x20] sm:$0xff]
    %v173 = vld [vmem:[#allocation7 + $0x28] sm:$0xff]
    %v174 = vld [vmem:[#allocation7 + $0x30] sm:$0xff]
    %v175 = vld [vmem:[#allocation7 + $0x38] sm:$0xff]
    %v176 = vld [vmem:[#allocation7 + $0x40] sm:$0xff]
    %v177 = vld [vmem:[#allocation7 + $0x48] sm:$0xff]
    %v178 = vld [vmem:[#allocation7 + $0x50] sm:$0xff]
    %v179 = vld [vmem:[#allocation7 + $0x58] sm:$0xff]
    %v180 = vld [vmem:[#allocation7 + $0x60] sm:$0xff]
    %v181 = vld [vmem:[#allocation7 + $0x68] sm:$0xff]
    %v182 = vld [vmem:[#allocation7 + $0x70] sm:$0xff]
    %v183 = vld [vmem:[#allocation7 + $0x78] sm:$0xff]
    %v184 = vld [vmem:[%s4] sm:$0x1]
    %v186 = vlaneseq
    %v187 = vshrl.u32 %v186, 7
    %v188 = vsub.s32 0, %v187
    %v189 = vrot.slane %v184, %v188
    %191 = vmatprep.subr.mxu0 0.0
    %192 = vmatpush1.msra.mxu0 %v183
    %193 = vmatprep.subr.mxu0 0.0
    %194 = vmatpush1.msra.mxu0 %v182
    %195 = vmatprep.subr.mxu0 0.0
    %196 = vmatpush1.msra.mxu0 %v181
    %197 = vmatprep.subr.mxu0 0.0
    %198 = vmatpush1.msra.mxu0 %v180
    %199 = vmatprep.subr.mxu0 0.0
    %200 = vmatpush1.msra.mxu0 %v179
    %201 = vmatprep.subr.mxu0 0.0
    %202 = vmatpush1.msra.mxu0 %v178
    %203 = vmatprep.subr.mxu0 0.0
    %204 = vmatpush1.msra.mxu0 %v177
    %205 = vmatprep.subr.mxu0 0.0
    %206 = vmatpush1.msra.mxu0 %v176
    %207 = vmatprep.subr.mxu0 0.0
    %208 = vmatpush1.msra.mxu0 %v175
    %209 = vmatprep.subr.mxu0 0.0
    %210 = vmatpush1.msra.mxu0 %v174
    %211 = vmatprep.subr.mxu0 0.0
    %212 = vmatpush1.msra.mxu0 %v173
    %213 = vmatprep.subr.mxu0 0.0
    %214 = vmatpush1.msra.mxu0 %v172
    %215 = vmatprep.subr.mxu0 0.0
    %216 = vmatpush1.msra.mxu0 %v171
    %217 = vmatprep.subr.mxu0 0.0
    %218 = vmatpush1.msra.mxu0 %v170
    %219 = vmatprep.subr.mxu0 0.0
    %220 = vmatpush1.msra.mxu0 %v169
    %221 = vmatprep.subr.mxu0 0.0
    %222 = vmatpush1.msra.mxu0 %v168
    %223 = vmatprep.subr.mxu0 0.0
    %224 = vmatpush2.msra.mxu0 0.0
    %225 = vmatprep.subr.mxu0 0.0
    %226 = vmatpush2.msra.mxu0 0.0
    %227 = vmatprep.subr.mxu0 0.0
    %228 = vmatpush2.msra.mxu0 0.0
    %229 = vmatprep.subr.mxu0 0.0
    %230 = vmatpush2.msra.mxu0 0.0
    %231 = vmatprep.subr.mxu0 0.0
    %232 = vmatpush2.msra.mxu0 0.0
    %233 = vmatprep.subr.mxu0 0.0
    %234 = vmatpush2.msra.mxu0 0.0
    %235 = vmatprep.subr.mxu0 0.0
    %236 = vmatpush2.msra.mxu0 0.0
    %237 = vmatprep.subr.mxu0 0.0
    %238 = vmatpush2.msra.mxu0 0.0
    %239 = vmatprep.subr.mxu0 0.0
    %240 = vmatpush2.msra.mxu0 0.0
    %241 = vmatprep.subr.mxu0 0.0
    %242 = vmatpush2.msra.mxu0 0.0
    %243 = vmatprep.subr.mxu0 0.0
    %244 = vmatpush2.msra.mxu0 0.0
    %245 = vmatprep.subr.mxu0 0.0
    %246 = vmatpush2.msra.mxu0 0.0
    %247 = vmatprep.subr.mxu0 0.0
    %248 = vmatpush2.msra.mxu0 0.0
    %249 = vmatprep.subr.mxu0 0.0
    %250 = vmatpush2.msra.mxu0 0.0
    %251 = vmatprep.subr.mxu0 0.0
    %252 = vmatpush2.msra.mxu0 0.0
    %253 = vmatprep.subr.mxu0 0.0
    %254 = vmatpush2.msra.mxu0 0.0
    %255 = vmatprep.mubr.f32.mxu0 0.0
    %256 = vmatmul.mubr.f32.gmra.mxu0 %v167
    %v257 = vpop.f32.mrf.mxu0
    %v258 = vadd.f32 %v189, %v257
    %v259 = vpop.f32.mrf.mxu0
    %260 = vdwg.mxu0
    %v261 = vmax.f32 %v258, 0.0
    %v262 = vld [vmem:[#allocation8] sm:$0xff]
    %v263 = vld [vmem:[#allocation8 + $0x8] sm:$0xff]
    %v264 = vld [vmem:[#allocation8 + $0x10] sm:$0xff]
    %v265 = vld [vmem:[#allocation8 + $0x18] sm:$0xff]
    %v266 = vld [vmem:[#allocation8 + $0x20] sm:$0xff]
    %v267 = vld [vmem:[#allocation8 + $0x28] sm:$0xff]
    %v268 = vld [vmem:[#allocation8 + $0x30] sm:$0xff]
    %v269 = vld [vmem:[#allocation8 + $0x38] sm:$0xff]
    %v270 = vld [vmem:[#allocation8 + $0x40] sm:$0xff]
    %v271 = vld [vmem:[#allocation8 + $0x48] sm:$0xff]
    %v272 = vld [vmem:[#allocation8 + $0x50] sm:$0xff]
    %v273 = vld [vmem:[#allocation8 + $0x58] sm:$0xff]
    %v274 = vld [vmem:[#allocation8 + $0x60] sm:$0xff]
    %v275 = vld [vmem:[#allocation8 + $0x68] sm:$0xff]
    %v276 = vld [vmem:[#allocation8 + $0x70] sm:$0xff]
    %v277 = vld [vmem:[#allocation8 + $0x78] sm:$0xff]
    %v278 = vld [vmem:[%s6] sm:$0x1]
    %v280 = vlaneseq
    %v281 = vshrl.u32 %v280, 7
    %v282 = vsub.s32 0, %v281
    %v283 = vrot.slane %v278, %v282
    %285 = vmatprep.subr.mxu0 0.0
    %286 = vmatpush1.msra.mxu0 %v277
    %287 = vmatprep.subr.mxu0 0.0
    %288 = vmatpush1.msra.mxu0 %v276
    %289 = vmatprep.subr.mxu0 0.0
    %290 = vmatpush1.msra.mxu0 %v275
    %291 = vmatprep.subr.mxu0 0.0
    %292 = vmatpush1.msra.mxu0 %v274
    %293 = vmatprep.subr.mxu0 0.0
    %294 = vmatpush1.msra.mxu0 %v273
    %295 = vmatprep.subr.mxu0 0.0
    %296 = vmatpush1.msra.mxu0 %v272
    %297 = vmatprep.subr.mxu0 0.0
    %298 = vmatpush1.msra.mxu0 %v271
    %299 = vmatprep.subr.mxu0 0.0
    %300 = vmatpush1.msra.mxu0 %v270
    %301 = vmatprep.subr.mxu0 0.0
    %302 = vmatpush1.msra.mxu0 %v269
    %303 = vmatprep.subr.mxu0 0.0
    %304 = vmatpush1.msra.mxu0 %v268
    %305 = vmatprep.subr.mxu0 0.0
    %306 = vmatpush1.msra.mxu0 %v267
    %307 = vmatprep.subr.mxu0 0.0
    %308 = vmatpush1.msra.mxu0 %v266
    %309 = vmatprep.subr.mxu0 0.0
    %310 = vmatpush1.msra.mxu0 %v265
    %311 = vmatprep.subr.mxu0 0.0
    %312 = vmatpush1.msra.mxu0 %v264
    %313 = vmatprep.subr.mxu0 0.0
    %314 = vmatpush1.msra.mxu0 %v263
    %315 = vmatprep.subr.mxu0 0.0
    %316 = vmatpush1.msra.mxu0 %v262
    %317 = vmatprep.subr.mxu0 0.0
    %318 = vmatpush2.msra.mxu0 0.0
    %319 = vmatprep.subr.mxu0 0.0
    %320 = vmatpush2.msra.mxu0 0.0
    %321 = vmatprep.subr.mxu0 0.0
    %322 = vmatpush2.msra.mxu0 0.0
    %323 = vmatprep.subr.mxu0 0.0
    %324 = vmatpush2.msra.mxu0 0.0
    %325 = vmatprep.subr.mxu0 0.0
    %326 = vmatpush2.msra.mxu0 0.0
    %327 = vmatprep.subr.mxu0 0.0
    %328 = vmatpush2.msra.mxu0 0.0
    %329 = vmatprep.subr.mxu0 0.0
    %330 = vmatpush2.msra.mxu0 0.0
    %331 = vmatprep.subr.mxu0 0.0
    %332 = vmatpush2.msra.mxu0 0.0
    %333 = vmatprep.subr.mxu0 0.0
    %334 = vmatpush2.msra.mxu0 0.0
    %335 = vmatprep.subr.mxu0 0.0
    %336 = vmatpush2.msra.mxu0 0.0
    %337 = vmatprep.subr.mxu0 0.0
    %338 = vmatpush2.msra.mxu0 0.0
    %339 = vmatprep.subr.mxu0 0.0
    %340 = vmatpush2.msra.mxu0 0.0
    %341 = vmatprep.subr.mxu0 0.0
    %342 = vmatpush2.msra.mxu0 0.0
    %343 = vmatprep.subr.mxu0 0.0
    %344 = vmatpush2.msra.mxu0 0.0
    %345 = vmatprep.subr.mxu0 0.0
    %346 = vmatpush2.msra.mxu0 0.0
    %347 = vmatprep.subr.mxu0 0.0
    %348 = vmatpush2.msra.mxu0 0.0
    %349 = vmatprep.mubr.f32.mxu0 0.0
    %350 = vmatmul.mubr.f32.gmra.mxu0 %v261
    %v351 = vpop.f32.mrf.mxu0
    %v352 = vadd.f32 %v283, %v351
    %v353 = vpop.f32.mrf.mxu0
    %354 = vdwg.mxu0
    %v355 = vtanh.pop %v352
    %v356 = vld [vmem:[%s7] sm:$0x1]
    %v357 = vlaneseq
    %v358 = vshrl.u32 %v357, 7
    %v359 = vsub.s32 0, %v358
    %v360 = vrot.slane %v356, %v359
    %v361 = vmul.f32 %v360, %v355
    %v362 = vld [vmem:[%s7 + $0x1] sm:$0x1]
    %v363 = vlaneseq
    %v364 = vshrl.u32 %v363, 7
    %v365 = vsub.s32 0, %v364
    %v366 = vrot.slane %v362, %v365
    %v367 = vadd.f32 %v361, %v366
    %368 = vst [vmem:[#allocation10] sm:$0xff] %v367
    // Predicated region
    $region50: #{_forward_impl.1} parent=1 // pred_check
      _
    $region51: #{_forward_impl.1} parent=1 // pred_check_branch
      %370 = sbr.rel (0) target = $region53
    $region52: #{_forward_impl.1} parent=1 // pred_region
      %s372 = ssub.s32 128, 128
      %373 = vsyncadd [#allocation4], %s372
      %s375 = sshll.u32 [#allocation10], 4
      %s376 = int_to_ptr.vmem [resolvable:$true] %s375
      %378 = dma.vmem_to_hbm [thread:$0]  %s376, 128, %s8, [#allocation4]
    $region53: #{_forward_impl.1} parent=1 // pred_fallthru
      _
    // Predicated region
    $region54: #{_forward_impl.1} parent=1 // pred_check
      _
    $region55: #{_forward_impl.1} parent=1 // pred_check_branch
      %380 = sbr.rel (0) target = $region57
    $region56: #{_forward_impl.1} parent=1 // pred_region
      %381 = dma.done [#allocation4], 128
    $region57: #{_forward_impl.1} parent=1 // pred_fallthru
      _
    %382 = vsyncpa [#allocation3], 1
    %383 = vsyncpa [#allocation6], 1
    %384 = vsyncpa [#allocation9], 1
    %385 = vsyncpa [#allocation4], 1

</llo_original>
